<compile_context>
chip_gen: v7x
topology: tpu7x:2x2x1
jax: 0.10.0
libtpu: 0.0.40
codegen_flags: <defaults>
</compile_context>

<pallas_src>
import functools

import jax
import jax.numpy as jnp
import numpy as np
from jax.experimental import pallas as pl
from jax.experimental.pallas import tpu as pltpu


# ---------------------------------------------------------------------------
# Kernel 1: fused QKV projection + head split (+ softmax scale folded into q)
# ---------------------------------------------------------------------------
def _qkv_proj_kernel(x_ref, w_ref, q_ref, k_ref, v_ref, *, heads, dim_head):
    """x_ref: (1, n, dim) f32; w_ref: (dim, 3*inner) bf16;
    q/k/v_ref: (1, heads, n, dim_head) bf16 (q pre-scaled)."""
    inner = heads * dim_head
    scale = dim_head ** (-0.5)

    # Cast activations to bf16 *inside* VMEM: the block is DMA'd once as f32
    # (4 B/elem) instead of a separate wrapper-side cast pass (8 B/elem HBM).
    xb = x_ref[0].astype(jnp.bfloat16)          # (n, dim)        bf16
    w = w_ref[...]                              # (dim, 3*inner)  bf16

    # Single fused QKV matmul on the MXU, f32 accumulation.
    qkv = jnp.dot(xb, w, preferred_element_type=jnp.float32)  # (n, 3*inner) f32
    n = qkv.shape[0]

    def heads_major(t):                         # (n, inner) -> (heads, n, d)
        # ONE reshape + ONE transpose; no per-head slice/stack relayouts.
        return jnp.transpose(t.reshape(n, heads, dim_head), (1, 0, 2))

    q = heads_major(qkv[:, 0 * inner:1 * inner])
    k = heads_major(qkv[:, 1 * inner:2 * inner])
    v = heads_major(qkv[:, 2 * inner:3 * inner])

    # Fold the softmax scale into the single q cast (one fused VPU pass).
    q_ref[0] = (q * scale).astype(q_ref.dtype)
    k_ref[0] = k.astype(k_ref.dtype)
    v_ref[0] = v.astype(v_ref.dtype)


# ---------------------------------------------------------------------------
# Kernel 2: heads-batched attention over a q tile (no in-kernel head relayout)
# ---------------------------------------------------------------------------
def _mha_kernel(q_ref, k_ref, v_ref, o_ref, *, bf16_softmax):
    """q_ref: (1, heads, tq, d) bf16 (pre-scaled); k/v_ref: (1, heads, n, d) bf16;
    o_ref: (1, tq, heads*d)."""
    q = q_ref[0]                                # (heads, tq, d)
    k = k_ref[0]                                # (heads, n,  d)
    v = v_ref[0]                                # (heads, n,  d)
    heads, tq, d = q.shape

    # scores = q @ k^T as ONE heads-batched MXU matmul, f32 accumulation.
    dots = jax.lax.dot_general(
        q, k,
        dimension_numbers=(((2,), (2,)), ((0,), (0,))),
        preferred_element_type=jnp.float32,
    )                                           # (heads, tq, n) f32

    m = jnp.max(dots, axis=-1, keepdims=True)   # (heads, tq, 1) f32
    if bf16_softmax:
        # v6e/v7x: at d<=128 the MXU is under-filled and the single EUP doing
        # heads*tq*n exps is the binding slot; bf16 exp ~doubles its
        # throughput and feeds the MXU directly (no extra f32->bf16 pass).
        e = jnp.exp((dots - m).astype(jnp.bfloat16))     # (heads, tq, n) bf16
    else:
        # v5e: no bf16 VPU/EUP -> keep softmax math in f32.
        e = jnp.exp(dots - m)                            # (heads, tq, n) f32
    # Row sums accumulated in f32 regardless of e's dtype.
    s = jnp.sum(e, axis=-1, keepdims=True, dtype=jnp.float32)  # (heads, tq, 1)

    # attn @ v, heads-batched, f32 accumulation.
    out_h = jax.lax.dot_general(
        e.astype(jnp.bfloat16), v,
        dimension_numbers=(((2,), (1,)), ((0,), (0,))),
        preferred_element_type=jnp.float32,
    )                                           # (heads, tq, d) f32

    # Deferred normalization: per-row reciprocal on the EUP, O(heads*tq) values
    # (approx=True: ~2^-12 rel. error, well inside the bf16-operand tolerance).
    out_h = out_h * pl.reciprocal(s, approx=True)

    # Lane-dense output tile: ONE transpose + reshape, single full-width store.
    out = jnp.transpose(out_h, (1, 0, 2)).reshape(tq, heads * d)
    o_ref[0] = out.astype(o_ref.dtype)


# ---------------------------------------------------------------------------
# Wrappers
# ---------------------------------------------------------------------------
def prepare_qkv_weight(w_qkv):
    """One-time conversion of the PyTorch Linear weight (3*inner, dim) into the
    kernel layout (dim, 3*inner) bf16.  Do this at parameter-load time so the
    forward pass does not pay an HBM read+write of the weight on every call."""
    return jnp.transpose(w_qkv, (1, 0)).astype(jnp.bfloat16)


def _bf16_softmax_default():
    """bf16 exp on v6e/v7x (EUP-bound there); f32 on v5e / older / unknown."""
    try:
        kind = jax.devices()[0].device_kind.lower()
    except Exception:
        return False
    return ("v6" in kind) or ("v7" in kind)


def _pick_q_tile(n):
    for t in (256, 128):
        if n % t == 0:
            return t
    # TODO(synk): ragged n (not a multiple of 128) falls back to a single q
    #             tile; pad or mask the q axis for long ragged sequences.
    return n


def attention_pallas(x, w_qkv_t, *, heads, dim_head, out_dtype=None,
                     bf16_softmax=None):
    """x: (b, n, dim) f32; w_qkv_t: (dim, 3*inner) bf16 from prepare_qkv_weight."""
    b, n, dim = x.shape
    inner = heads * dim_head
    assert w_qkv_t.shape == (dim, 3 * inner)
    if out_dtype is None:
        # Emit bf16 here if the downstream to_out Linear consumes bf16.
        out_dtype = x.dtype
    if bf16_softmax is None:
        bf16_softmax = _bf16_softmax_default()

    # ---- Kernel 1: QKV projection -> head-major bf16 q/k/v -----------------
    qkv_sds = jax.ShapeDtypeStruct((b, heads, n, dim_head), jnp.bfloat16)
    q, k, v = pl.pallas_call(
        functools.partial(_qkv_proj_kernel, heads=heads, dim_head=dim_head),
        out_shape=(qkv_sds, qkv_sds, qkv_sds),
        grid_spec=pltpu.PrefetchScalarGridSpec(
            num_scalar_prefetch=0,
            grid=(b,),
            in_specs=[
                pl.BlockSpec((1, n, dim), lambda i: (i, 0, 0)),
                # Grid-invariant weight block: block index never changes, so it
                # is fetched once and kept resident across the batch loop.
                pl.BlockSpec((dim, 3 * inner), lambda i: (0, 0)),
            ],
            out_specs=[
                pl.BlockSpec((1, heads, n, dim_head), lambda i: (i, 0, 0, 0)),
                pl.BlockSpec((1, heads, n, dim_head), lambda i: (i, 0, 0, 0)),
                pl.BlockSpec((1, heads, n, dim_head), lambda i: (i, 0, 0, 0)),
            ],
        ),
        compiler_params=pltpu.CompilerParams(
            dimension_semantics=("parallel",),
            # Generous but safe on all generations (v7x has 64 MiB physical).
            vmem_limit_bytes=48 * 1024 * 1024,
        ),
        cost_estimate=pl.CostEstimate(
            flops=2 * b * n * dim * 3 * inner,
            transcendentals=0,
            bytes_accessed=(b * n * dim * x.dtype.itemsize
                            + dim * 3 * inner * 2
                            + 3 * b * n * inner * 2),
        ),
    )(x, w_qkv_t)

    # ---- Kernel 2: q-tiled, heads-batched attention -------------------------
    tq = _pick_q_tile(n)
    nq = n // tq
    out = pl.pallas_call(
        functools.partial(_mha_kernel, bf16_softmax=bf16_softmax),
        out_shape=jax.ShapeDtypeStruct((b, n, inner), out_dtype),
        grid_spec=pltpu.PrefetchScalarGridSpec(
            num_scalar_prefetch=0,
            grid=(b, nq),                        # q-tile axis innermost: k/v
            in_specs=[                           # stay resident per batch elem
                pl.BlockSpec((1, heads, tq, dim_head), lambda i, j: (i, 0, j, 0)),
                pl.BlockSpec((1, heads, n, dim_head), lambda i, j: (i, 0, 0, 0)),
                pl.BlockSpec((1, heads, n, dim_head), lambda i, j: (i, 0, 0, 0)),
            ],
            out_specs=pl.BlockSpec((1, tq, inner), lambda i, j: (i, j, 0)),
        ),
        compiler_params=pltpu.CompilerParams(
            dimension_semantics=("parallel", "parallel"),
            vmem_limit_bytes=48 * 1024 * 1024,
        ),
        cost_estimate=pl.CostEstimate(
            flops=4 * b * heads * n * n * dim_head,
            transcendentals=b * heads * n * n,
            bytes_accessed=(3 * b * n * inner * 2
                            + b * n * inner * jnp.dtype(out_dtype).itemsize),
        ),
    )(q, k, v)
    return out


def attention_ref(x, w_qkv, *, heads, dim_head):
    """Pure-JAX f32 reference matching the PyTorch forward (mask=None)."""
    b, n, dim = x.shape
    inner_dim = heads * dim_head
    scale = dim_head ** (-0.5)
    qkv = jnp.einsum("bnd,od->bno", x, w_qkv)                   # (b, n, 3*inner)
    q, k, v = jnp.split(qkv, 3, axis=-1)

    def to_heads(t):
        return jnp.transpose(t.reshape(b, n, heads, dim_head), (0, 2, 1, 3))

    q, k, v = map(to_heads, (q, k, v))                          # (b, h, n, d)
    dots = jnp.einsum("bhid,bhjd->bhij", q, k) * scale
    attn = jax.nn.softmax(dots, axis=-1)
    out = jnp.einsum("bhij,bhjd->bhid", attn, v)                # (b, h, n, d)
    return jnp.transpose(out, (0, 2, 1, 3)).reshape(b, n, inner_dim)


if __name__ == "__main__":
    # Small shapes consistent with the module.
    batch, seq, dim = 2, 8, 32
    heads, dim_head = 4, 8          # inner_dim = 32
    inner_dim = heads * dim_head

    key = jax.random.PRNGKey(0)
    kx, kw = jax.random.split(key)
    x = jax.random.normal(kx, (batch, seq, dim), dtype=jnp.float32)
    # Deterministic init of the Linear weight (PyTorch layout: (out, in)).
    w_qkv = jax.random.normal(kw, (3 * inner_dim, dim), dtype=jnp.float32) * (dim ** -0.5)

    # One-time weight prep (parameter-load time, not per forward call).
    w_t = prepare_qkv_weight(w_qkv)

    out = attention_pallas(x, w_t, heads=heads, dim_head=dim_head)
    out = jax.block_until_ready(out)

    ref = attention_ref(x, w_qkv, heads=heads, dim_head=dim_head)
    # Tolerance reflects bf16 MXU operands / bf16 q,k,v round trip (f32
    # accumulation) vs. the f32 reference; structural errors would be O(1).
    np.testing.assert_allclose(np.asarray(out), np.asarray(ref), rtol=5e-2, atol=5e-2)

    print("KERNEL_OK")
</pallas_src>

<mosaic_0001>
module attributes {stable_mosaic.version = 11 : i64} {
  func.func @_qkv_proj_kernel(%arg0: i32, %arg1: memref<1x8x32xf32, #tpu.memory_space<vmem>>, %arg2: memref<32x96xbf16, #tpu.memory_space<vmem>>, %arg3: memref<1x4x8x8xbf16, #tpu.memory_space<vmem>>, %arg4: memref<1x4x8x8xbf16, #tpu.memory_space<vmem>>, %arg5: memref<1x4x8x8xbf16, #tpu.memory_space<vmem>>) attributes {dimension_semantics = [#tpu.dimension_semantics<parallel>], iteration_bounds = array<i64: 2>, scalar_prefetch = 0 : i64, scratch_operands = 0 : i64, tpu.core_type = #tpu.core_type<tc>, window_params = [{transform_indices = @transform_0, window_bounds = array<i64: 1, 8, 32>}, {pipeline_mode = #tpu.pipeline_mode<synchronous>, transform_indices = @transform_1, window_bounds = array<i64: 32, 96>}, {transform_indices = @transform_2, window_bounds = array<i64: 1, 4, 8, 8>}, {transform_indices = @transform_3, window_bounds = array<i64: 1, 4, 8, 8>}, {transform_indices = @transform_4, window_bounds = array<i64: 1, 4, 8, 8>}]} {
    %c0 = arith.constant 0 : index
    %c0_0 = arith.constant 0 : index
    %c0_1 = arith.constant 0 : index
    %0 = vector.load %arg1[%c0, %c0_0, %c0_1] : memref<1x8x32xf32, #tpu.memory_space<vmem>>, vector<1x8x32xf32>
    %1 = vector.shape_cast %0 : vector<1x8x32xf32> to vector<8x32xf32>
    %2 = arith.truncf %1 : vector<8x32xf32> to vector<8x32xbf16>
    %c0_2 = arith.constant 0 : index
    %c0_3 = arith.constant 0 : index
    %3 = vector.load %arg2[%c0_2, %c0_3] : memref<32x96xbf16, #tpu.memory_space<vmem>>, vector<32x96xbf16>
    %cst = arith.constant dense<0.000000e+00> : vector<8x96xf32>
    %4 = tpu.matmul %2, %3, %cst {dimension_numbers = #tpu.dot_dimension_numbers<[1], [0], [0], [1], [0, 0, 1, 1], [], []>} : vector<8x32xbf16>, vector<32x96xbf16>, vector<8x96xf32> -> vector<8x96xf32>
    %5 = vector.extract_strided_slice %4 {offsets = [0, 0], sizes = [8, 32], strides = [1, 1]} : vector<8x96xf32> to vector<8x32xf32>
    %6 = vector.shape_cast %5 : vector<8x32xf32> to vector<8x4x8xf32>
    %7 = tpu.transpose %6, [1, 0, 2] : vector<8x4x8xf32> -> vector<4x8x8xf32>
    %8 = vector.extract_strided_slice %4 {offsets = [0, 32], sizes = [8, 32], strides = [1, 1]} : vector<8x96xf32> to vector<8x32xf32>
    %9 = vector.shape_cast %8 : vector<8x32xf32> to vector<8x4x8xf32>
    %10 = tpu.transpose %9, [1, 0, 2] : vector<8x4x8xf32> -> vector<4x8x8xf32>
    %11 = vector.extract_strided_slice %4 {offsets = [0, 64], sizes = [8, 32], strides = [1, 1]} : vector<8x96xf32> to vector<8x32xf32>
    %12 = vector.shape_cast %11 : vector<8x32xf32> to vector<8x4x8xf32>
    %13 = tpu.transpose %12, [1, 0, 2] : vector<8x4x8xf32> -> vector<4x8x8xf32>
    %cst_4 = arith.constant 0.353553385 : f32
    %14 = vector.broadcast %cst_4 : f32 to vector<4x8x8xf32>
    %15 = arith.mulf %7, %14 : vector<4x8x8xf32>
    %16 = arith.truncf %15 : vector<4x8x8xf32> to vector<4x8x8xbf16>
    %c0_5 = arith.constant 0 : index
    %c0_6 = arith.constant 0 : index
    %c0_7 = arith.constant 0 : index
    %c0_8 = arith.constant 0 : index
    %17 = vector.load %arg3[%c0_5, %c0_6, %c0_7, %c0_8] : memref<1x4x8x8xbf16, #tpu.memory_space<vmem>>, vector<1x4x8x8xbf16>
    %18 = vector.shape_cast %17 : vector<1x4x8x8xbf16> to vector<4x8x8xbf16>
    %19 = vector.shape_cast %16 : vector<4x8x8xbf16> to vector<1x4x8x8xbf16>
    tpu.vector_store %arg3[%c0_5, %c0_6, %c0_7, %c0_8], %19 {strides = array<i32>} : memref<1x4x8x8xbf16, #tpu.memory_space<vmem>>, vector<1x4x8x8xbf16>,
    %20 = arith.truncf %10 : vector<4x8x8xf32> to vector<4x8x8xbf16>
    %c0_9 = arith.constant 0 : index
    %c0_10 = arith.constant 0 : index
    %c0_11 = arith.constant 0 : index
    %c0_12 = arith.constant 0 : index
    %21 = vector.load %arg4[%c0_9, %c0_10, %c0_11, %c0_12] : memref<1x4x8x8xbf16, #tpu.memory_space<vmem>>, vector<1x4x8x8xbf16>
    %22 = vector.shape_cast %21 : vector<1x4x8x8xbf16> to vector<4x8x8xbf16>
    %23 = vector.shape_cast %20 : vector<4x8x8xbf16> to vector<1x4x8x8xbf16>
    tpu.vector_store %arg4[%c0_9, %c0_10, %c0_11, %c0_12], %23 {strides = array<i32>} : memref<1x4x8x8xbf16, #tpu.memory_space<vmem>>, vector<1x4x8x8xbf16>,
    %24 = arith.truncf %13 : vector<4x8x8xf32> to vector<4x8x8xbf16>
    %c0_13 = arith.constant 0 : index
    %c0_14 = arith.constant 0 : index
    %c0_15 = arith.constant 0 : index
    %c0_16 = arith.constant 0 : index
    %25 = vector.load %arg5[%c0_13, %c0_14, %c0_15, %c0_16] : memref<1x4x8x8xbf16, #tpu.memory_space<vmem>>, vector<1x4x8x8xbf16>
    %26 = vector.shape_cast %25 : vector<1x4x8x8xbf16> to vector<4x8x8xbf16>
    %27 = vector.shape_cast %24 : vector<4x8x8xbf16> to vector<1x4x8x8xbf16>
    tpu.vector_store %arg5[%c0_13, %c0_14, %c0_15, %c0_16], %27 {strides = array<i32>} : memref<1x4x8x8xbf16, #tpu.memory_space<vmem>>, vector<1x4x8x8xbf16>,
    return
  }
  func.func @transform_0(%arg0: i32) -> (i32, i32, i32) {
    %c0_i32 = arith.constant 0 : i32
    %c0_i32_0 = arith.constant 0 : i32
    %c0_i32_1 = arith.constant 0 : i32
    return %arg0, %c0_i32, %c0_i32_0 : i32, i32, i32
  }
  func.func @transform_1(%arg0: i32) -> (i32, i32) {
    %c0_i32 = arith.constant 0 : i32
    %c0_i32_0 = arith.constant 0 : i32
    %c0_i32_1 = arith.constant 0 : i32
    return %c0_i32, %c0_i32_0 : i32, i32
  }
  func.func @transform_2(%arg0: i32) -> (i32, i32, i32, i32) {
    %c0_i32 = arith.constant 0 : i32
    %c0_i32_0 = arith.constant 0 : i32
    %c0_i32_1 = arith.constant 0 : i32
    %c0_i32_2 = arith.constant 0 : i32
    return %arg0, %c0_i32, %c0_i32_0, %c0_i32_1 : i32, i32, i32, i32
  }
  func.func @transform_3(%arg0: i32) -> (i32, i32, i32, i32) {
    %c0_i32 = arith.constant 0 : i32
    %c0_i32_0 = arith.constant 0 : i32
    %c0_i32_1 = arith.constant 0 : i32
    %c0_i32_2 = arith.constant 0 : i32
    return %arg0, %c0_i32, %c0_i32_0, %c0_i32_1 : i32, i32, i32, i32
  }
  func.func @transform_4(%arg0: i32) -> (i32, i32, i32, i32) {
    %c0_i32 = arith.constant 0 : i32
    %c0_i32_0 = arith.constant 0 : i32
    %c0_i32_1 = arith.constant 0 : i32
    %c0_i32_2 = arith.constant 0 : i32
    return %arg0, %c0_i32, %c0_i32_0, %c0_i32_1 : i32, i32, i32, i32
  }
}

</mosaic_0001>

<llo_original>
// kernel: tpu_custom_call.1
$region0: #{tpu_custom_call.1}
  #allocation0 [shape = 'u32[]', space=smem, size = 0x4, offset = 0x4, fixed_abs, tag = 'smem constant byte address 0x4 - core index']
  #allocation1 [shape = 'u32[144,128]{1,0:T(1,128)}', space=vmem, size = 0x12000, scoped, tag = 'internal scratch']
  %s0 = inlined_call_operand.hbm [shape: f32[2,8,32], index: 0, kind: input, shape index: {}]
  %s1 = inlined_call_operand.hbm [shape: bf16[32,96], index: 1, kind: input, shape index: {}]
  %s2 = inlined_call_operand.hbm [shape: bf16[2,4,8,8], index: 2, kind: output, shape index: {0}]
  %s3 = inlined_call_operand.hbm [shape: bf16[2,4,8,8], index: 3, kind: output, shape index: {1}]
  %s4 = inlined_call_operand.hbm [shape: bf16[2,4,8,8], index: 4, kind: output, shape index: {2}]
  %5 = xla_tuple %s2, %s3, %s4
  %s6 = sld [smem:[#allocation0]]
  $region65: #{tpu_custom_call.1} parent=0
    _
  %s8 = ssub.s32 1, %s6
  %s9 = scalar_select 0, %s8, %s6
  $region1: #{tpu_custom_call.1} parent=0
    #allocation2 [shape = 'u8[8192]{0}', space=vmem, size = 0x2000, scoped, tag = 'input window, operand 0']
    #allocation3 [shape = 's32[2]{0}', space=sflag, size = 0x8, scoped, tag = 'scoped memory for tpu_custom_call.1']
    #allocation4 [shape = 's32[2]{0}', space=sflag, size = 0x8, scoped, tag = 'scoped memory for tpu_custom_call.1']
    #allocation5 [shape = 'u8[8192]{0}', space=vmem, size = 0x2000, scoped, tag = 'input window, operand 1, single buffered']
    #allocation6 [shape = 's32[1]{0}', space=sflag, size = 0x4, scoped, tag = 'scoped memory for tpu_custom_call.1']
    #allocation7 [shape = 'u8[16384]{0}', space=vmem, size = 0x4000, scoped, tag = 'output window, operand 0']
    #allocation8 [shape = 'u8[16384]{0}', space=vmem, size = 0x4000, scoped, tag = 'output window, operand 1']
    #allocation9 [shape = 's32[2]{0}', space=sflag, size = 0x8, scoped, tag = 'scoped memory for tpu_custom_call.1']
    #allocation10 [shape = 'u8[16384]{0}', space=vmem, size = 0x4000, scoped, tag = 'output window, operand 2']
    %10 = vsyncpa [#allocation3], 0
    %s11 = scalar_lea.sflag [#allocation3], 1
    %12 = vsyncpa %s11, 0
    %13 = vsyncpa [#allocation6], 0
    %14 = vsyncpa [#allocation4], 0
    %s15 = scalar_lea.sflag [#allocation4], 1
    %16 = vsyncpa %s15, 0
    %17 = vsyncpa [#allocation9], 0
    %s18 = scalar_lea.sflag [#allocation9], 1
    %19 = vsyncpa %s18, 0
    loop: start=0, step=1, limit=4
    $region2: #{tpu_custom_call.1} parent=1 // loop_pre_header
      _
    $region3: #{tpu_custom_call.1} parent=1 // loop_header
      %s21 = sphi 0, %s25
      %p22 = scmp.ge.s32.totalorder %s21, 4
      %s31 = sphi 0, %s33
      %s34 = sphi 0, %s31
      %s35 = sphi 0, %s34
      %s51 = sphi 0, %s35
      %s55 = sphi 0, %s55
      %s57 = sphi 0, %s55
      %s58 = sphi 0, %s57
      %s72 = sphi 0, %s58
      %s78 = sphi 0, %s80
      %s81 = sphi 0, %s78
      %s82 = sphi 0, %s81
      %s98 = sphi 0, %s82
      %s104 = sphi 0, %s106
      %s107 = sphi 0, %s104
      %s108 = sphi 0, %s107
      %s124 = sphi 0, %s108
      %s130 = sphi 0, %s132
      %s133 = sphi 0, %s130
      %s134 = sphi 0, %s133
      %s150 = sphi 0, %s134
    $region4: #{tpu_custom_call.1} parent=1 // loop_header_branch
      %24 = sbr.rel (%p22) target = $region8
    $region5: #{tpu_custom_call.1} parent=1 // loop_body
      %s26 = ssub.s32 %s21, 1
      %s27 = ssub.s32 %s21, 2
      %s28 = sadd.s32 %s21, 1
      %s29 = ssub.s32 %s21, %s28
      %p30 = scmp.eq.s32.totalorder %s29, 0
      %s32 = sadd.s32 %s31, 1
      %s33 = scalar_select %p30, %s31, %s32
      %p36 = pneg %p30
      %p37 = scmp.eq.s32.totalorder %s21, 1
      %p38 = por %p36, %p37
      %p39 = scmp.ne.s32.totalorder %s31, %s34
      %p40 = scmp.eq.s32.totalorder %s21, 0
      %p41 = por %p39, %p40
      %p42 = scmp.ne.s32.totalorder %s31, %s34
      %p43 = scmp.eq.s32.totalorder %s26, 1
      %p44 = por %p42, %p43
      %p45 = scmp.ne.s32.totalorder %s34, %s35
      %p46 = scmp.eq.s32.totalorder %s26, 0
      %p47 = por %p45, %p46
      %p48 = scmp.ne.s32.totalorder %s34, %s35
      %p49 = scmp.eq.s32.totalorder %s27, 1
      %p50 = por %p48, %p49
      %p52 = scmp.ne.s32.totalorder %s35, %s51
      %p53 = scmp.eq.s32.totalorder %s27, 0
      %p54 = por %p52, %p53
      %s56 = sadd.s32 %s55, 1
      %p59 = scmp.eq.s32.totalorder %s21, 1
      %p60 = scmp.ne.s32.totalorder %s55, %s57
      %p61 = scmp.eq.s32.totalorder %s21, 0
      %p62 = por %p60, %p61
      %p63 = scmp.ne.s32.totalorder %s55, %s57
      %p64 = scmp.eq.s32.totalorder %s26, 1
      %p65 = por %p63, %p64
      %p66 = scmp.ne.s32.totalorder %s57, %s58
      %p67 = scmp.eq.s32.totalorder %s26, 0
      %p68 = por %p66, %p67
      %p69 = scmp.ne.s32.totalorder %s57, %s58
      %p70 = scmp.eq.s32.totalorder %s27, 1
      %p71 = por %p69, %p70
      %p73 = scmp.ne.s32.totalorder %s58, %s72
      %p74 = scmp.eq.s32.totalorder %s27, 0
      %p75 = por %p73, %p74
      %s76 = ssub.s32 %s21, %s28
      %p77 = scmp.eq.s32.totalorder %s76, 0
      %s79 = sadd.s32 %s78, 1
      %s80 = scalar_select %p77, %s78, %s79
      %p83 = pneg %p77
      %p84 = scmp.eq.s32.totalorder %s21, 1
      %p85 = por %p83, %p84
      %p86 = scmp.ne.s32.totalorder %s78, %s81
      %p87 = scmp.eq.s32.totalorder %s21, 0
      %p88 = por %p86, %p87
      %p89 = scmp.ne.s32.totalorder %s78, %s81
      %p90 = scmp.eq.s32.totalorder %s26, 1
      %p91 = por %p89, %p90
      %p92 = scmp.ne.s32.totalorder %s81, %s82
      %p93 = scmp.eq.s32.totalorder %s26, 0
      %p94 = por %p92, %p93
      %p95 = scmp.ne.s32.totalorder %s81, %s82
      %p96 = scmp.eq.s32.totalorder %s27, 1
      %p97 = por %p95, %p96
      %p99 = scmp.ne.s32.totalorder %s82, %s98
      %p100 = scmp.eq.s32.totalorder %s27, 0
      %p101 = por %p99, %p100
      %s102 = ssub.s32 %s21, %s28
      %p103 = scmp.eq.s32.totalorder %s102, 0
      %s105 = sadd.s32 %s104, 1
      %s106 = scalar_select %p103, %s104, %s105
      %p109 = pneg %p103
      %p110 = scmp.eq.s32.totalorder %s21, 1
      %p111 = por %p109, %p110
      %p112 = scmp.ne.s32.totalorder %s104, %s107
      %p113 = scmp.eq.s32.totalorder %s21, 0
      %p114 = por %p112, %p113
      %p115 = scmp.ne.s32.totalorder %s104, %s107
      %p116 = scmp.eq.s32.totalorder %s26, 1
      %p117 = por %p115, %p116
      %p118 = scmp.ne.s32.totalorder %s107, %s108
      %p119 = scmp.eq.s32.totalorder %s26, 0
      %p120 = por %p118, %p119
      %p121 = scmp.ne.s32.totalorder %s107, %s108
      %p122 = scmp.eq.s32.totalorder %s27, 1
      %p123 = por %p121, %p122
      %p125 = scmp.ne.s32.totalorder %s108, %s124
      %p126 = scmp.eq.s32.totalorder %s27, 0
      %p127 = por %p125, %p126
      %s128 = ssub.s32 %s21, %s28
      %p129 = scmp.eq.s32.totalorder %s128, 0
      %s131 = sadd.s32 %s130, 1
      %s132 = scalar_select %p129, %s130, %s131
      %p135 = pneg %p129
      %p136 = scmp.eq.s32.totalorder %s21, 1
      %p137 = por %p135, %p136
      %p138 = scmp.ne.s32.totalorder %s130, %s133
      %p139 = scmp.eq.s32.totalorder %s21, 0
      %p140 = por %p138, %p139
      %p141 = scmp.ne.s32.totalorder %s130, %s133
      %p142 = scmp.eq.s32.totalorder %s26, 1
      %p143 = por %p141, %p142
      %p144 = scmp.ne.s32.totalorder %s133, %s134
      %p145 = scmp.eq.s32.totalorder %s26, 0
      %p146 = por %p144, %p145
      %p147 = scmp.ne.s32.totalorder %s133, %s134
      %p148 = scmp.eq.s32.totalorder %s27, 1
      %p149 = por %p147, %p148
      %p151 = scmp.ne.s32.totalorder %s134, %s150
      %p152 = scmp.eq.s32.totalorder %s27, 0
      %p153 = por %p151, %p152
      %p154 = scmp.le.s32.totalorder 1, %s21
      %p155 = scmp.lt.s32.totalorder %s21, 3
      %p156 = pnand %p154, %p155
      %p157 = pneg %p156
      // Predicated region
      $region9: #{tpu_custom_call.1} parent=5 // pred_check
        _
      $region10: #{tpu_custom_call.1} parent=5 // pred_check_branch
        %159 = sbr.rel (%p156) target = $region12
      $region11: #{tpu_custom_call.1} parent=5 // pred_region
        %s160 = ssub.s32 %s21, 1
        // Predicated region
        $region13: #{tpu_custom_call.1} parent=11 // pred_check
          %p161 = pneg %p68
        $region14: #{tpu_custom_call.1} parent=11 // pred_check_branch
          %163 = sbr.rel (%p161) target = $region16
        $region15: #{tpu_custom_call.1} parent=11 // pred_region
          %s165 = ssub.s32 256, 256
          %166 = vsyncadd [#allocation6], %s165
          %s167 = sshll.u32 [#allocation5], 4
          %s168 = int_to_ptr.vmem [resolvable:$true] %s167
          %173 = dma.hbm_to_vmem [thread:$0]  %s1, 256, %s168, [#allocation6], 64, 64, 4
        $region16: #{tpu_custom_call.1} parent=11 // pred_fallthru
          _
      $region12: #{tpu_custom_call.1} parent=5 // pred_fallthru
        _
      %p174 = scmp.lt.s32.totalorder %s21, 2
      // Predicated region
      $region17: #{tpu_custom_call.1} parent=5 // pred_check
        %p175 = pneg %p174
      $region18: #{tpu_custom_call.1} parent=5 // pred_check_branch
        %177 = sbr.rel (%p175) target = $region20
      $region19: #{tpu_custom_call.1} parent=5 // pred_region
        // Predicated region
        $region21: #{tpu_custom_call.1} parent=19 // pred_check
          %p178 = pneg %p41
        $region22: #{tpu_custom_call.1} parent=19 // pred_check_branch
          %180 = sbr.rel (%p178) target = $region24
        $region23: #{tpu_custom_call.1} parent=19 // pred_region
          %s181 = sand.u32 %s31, 1
          %s182 = scalar_lea.sflag [#allocation3], %s181
          %s183 = sand.u32 %s31, 1
          %s184 = smul.addr %s183, 8
          %s185 = scalar_lea.vmem [#allocation2], %s184
          %s187 = ssub.s32 128, 128
          %188 = vsyncadd %s182, %s187
          %s189 = smul.addr %s21, 128
          %s190 = scalar_lea.hbm %s0, %s189
          %s192 = sshll.u32 %s185, 4
          %s193 = int_to_ptr.vmem [resolvable:$true] %s192
          %195 = dma.hbm_to_vmem [thread:$0]  %s190, 128, %s193, %s182
        $region24: #{tpu_custom_call.1} parent=19 // pred_fallthru
          _
      $region20: #{tpu_custom_call.1} parent=5 // pred_fallthru
        _
      %p196 = scmp.le.s32.totalorder 1, %s21
      %p197 = scmp.lt.s32.totalorder %s21, 3
      %p198 = pnand %p196, %p197
      %p199 = pneg %p198
      // Predicated region
      $region25: #{tpu_custom_call.1} parent=5 // pred_check
        _
      $region26: #{tpu_custom_call.1} parent=5 // pred_check_branch
        %201 = sbr.rel (%p198) target = $region28
      $region27: #{tpu_custom_call.1} parent=5 // pred_region
        %s202 = ssub.s32 %s21, 1
        %s203 = sand.u32 %s34, 1
        %s204 = scalar_lea.sflag [#allocation3], %s203
        %s205 = sand.u32 %s34, 1
        %s206 = smul.addr %s205, 8
        %s207 = scalar_lea.vmem [#allocation2], %s206
        // Predicated region
        $region29: #{tpu_custom_call.1} parent=27 // pred_check
          %p208 = pneg %p47
        $region30: #{tpu_custom_call.1} parent=27 // pred_check_branch
          %210 = sbr.rel (%p208) target = $region32
        $region31: #{tpu_custom_call.1} parent=27 // pred_region
          %211 = dma.done %s204, 128
        $region32: #{tpu_custom_call.1} parent=27 // pred_fallthru
          _
        // Predicated region
        $region33: #{tpu_custom_call.1} parent=27 // pred_check
          %p212 = pneg %p68
        $region34: #{tpu_custom_call.1} parent=27 // pred_check_branch
          %214 = sbr.rel (%p212) target = $region36
        $region35: #{tpu_custom_call.1} parent=27 // pred_region
          %215 = dma.done [#allocation6], 256
        $region36: #{tpu_custom_call.1} parent=27 // pred_fallthru
          _
        %s216 = sand.u32 %s34, 1
        %s217 = scalar_lea.sflag [#allocation3], %s216
        %s218 = sand.u32 %s34, 1
        %s219 = smul.addr %s218, 8
        %s220 = scalar_lea.vmem [#allocation2], %s219
        %p221 = pneg %p47
        %p222 = pneg %p44
        %p223 = pneg %p68
        %p224 = pneg %p65
        %p225 = pneg %p94
        %p226 = pneg %p91
        %s227 = sand.u32 %s81, 1
        %s228 = scalar_lea.sflag [#allocation4], %s227
        %s229 = sand.u32 %s81, 1
        %s230 = smul.addr %s229, 16
        %s231 = scalar_lea.vmem [#allocation7], %s230
        %p232 = pneg %p120
        %p233 = pneg %p117
        %s234 = sand.u32 %s26, 1
        %s235 = scalar_lea.sflag [#allocation9], %s234
        %s236 = sand.u32 %s107, 1
        %s237 = smul.addr %s236, 16
        %s238 = scalar_lea.vmem [#allocation8], %s237
        %p239 = pneg %p146
        %p240 = pneg %p143
        %s241 = sand.u32 %s26, 1
        %s242 = scalar_lea.sflag [#allocation9], %s241
        %s243 = sand.u32 %s133, 1
        %s244 = smul.addr %s243, 16
        %s245 = scalar_lea.vmem [#allocation10], %s244
        %v247 = vld [vmem:[%s207] sm:$0xff]
        %v248 = vpack.c.bf16 %v247, %v247
        %v249 = vld [vmem:[#allocation5] sm:$0xf]
        %v250 = vld [vmem:[#allocation5 + $0x4] sm:$0xf]
        %v251 = vld [vmem:[#allocation5 + $0x8] sm:$0xf]
        %v252 = vld [vmem:[#allocation5 + $0xc] sm:$0xf]
        %v257 = vunpack.c.l.b16 %v249
        %v258 = vunpack.c.l.b16 %v250
        %v259 = vunpack.c.l.b16 %v251
        %v260 = vunpack.c.l.b16 %v252
        %v261 = vpack.c.b16 %v258, %v257
        %v262 = vpack.c.b16 %v260, %v259
        %vm265 = vcmask 261120
        %v267 = vsel %vm265, %v248, 0
        %269 = vmatprep.subr.bf16.mxu0 0
        %270 = vmatpush1.bf16.msra.mxu0 %v261
        %271 = vmatprep.subr.bf16.mxu0 0
        %272 = vmatpush1.bf16.msra.mxu0 %v262
        %273 = vmatprep.subr.bf16.mxu0 0
        %274 = vmatpush1.bf16.msra.mxu0 0
        %275 = vmatprep.subr.bf16.mxu0 0
        %276 = vmatpush1.bf16.msra.mxu0 0
        %277 = vmatprep.subr.bf16.mxu0 0
        %278 = vmatpush1.bf16.msra.mxu0 0
        %279 = vmatprep.subr.bf16.mxu0 0
        %280 = vmatpush1.bf16.msra.mxu0 0
        %281 = vmatprep.subr.bf16.mxu0 0
        %282 = vmatpush1.bf16.msra.mxu0 0
        %283 = vmatprep.subr.bf16.mxu0 0
        %284 = vmatpush1.bf16.msra.mxu0 0
        %285 = vmatprep.subr.bf16.mxu0 0
        %286 = vmatpush1.bf16.msra.mxu0 0
        %287 = vmatprep.subr.bf16.mxu0 0
        %288 = vmatpush1.bf16.msra.mxu0 0
        %289 = vmatprep.subr.bf16.mxu0 0
        %290 = vmatpush1.bf16.msra.mxu0 0
        %291 = vmatprep.subr.bf16.mxu0 0
        %292 = vmatpush1.bf16.msra.mxu0 0
        %293 = vmatprep.subr.bf16.mxu0 0
        %294 = vmatpush1.bf16.msra.mxu0 0
        %295 = vmatprep.subr.bf16.mxu0 0
        %296 = vmatpush1.bf16.msra.mxu0 0
        %297 = vmatprep.subr.bf16.mxu0 0
        %298 = vmatpush1.bf16.msra.mxu0 0
        %299 = vmatprep.subr.bf16.mxu0 0
        %300 = vmatpush1.bf16.msra.mxu0 0
        %301 = vmatprep.mubr.bf16.mxu0 0
        %302 = vmatmul.mubr.bf16.gmra.mrb[0].mxu0 %v267
        %v303 = vpop.f32.mrb[0].mxu0
        %v304 = vadd.f32 0.0, %v303
        %v305 = vpop.f32.mrb[0].mxu0
        %v306 = vpop.f32.mrb[0].mxu0
        %v307 = vpop.f32.mrb[0].mxu0
        %308 = vdwg.mxu0
        %310 = vrot.lane.b32.xlu0 %v304, 120
        %v311 = vpop.permute.xlu0 %310
        %313 = vrot.lane.b32.xlu0 %v304, 112
        %v314 = vpop.permute.xlu0 %313
        %316 = vrot.lane.b32.xlu0 %v304, 104
        %v317 = vpop.permute.xlu0 %316
        %v319 = vcombine.low %v304, %v314
        %v320 = vcombine.high %v304, %v314
        %v322 = vunpack.c.l.s4 1983009808
        %v323 = vunpack.c.0.s8 %v322
        %v324 = vlaneseq
        %v325 = vshrl.u32 %v324, 7
        %v326 = vsub.s32 %v323, %v325
        %v327 = vrot.slane %v319, %v326
        %v329 = vunpack.c.l.s4 1983009808
        %v330 = vunpack.c.0.s8 %v329
        %v331 = vlaneseq
        %v332 = vshrl.u32 %v331, 7
        %v333 = vsub.s32 %v330, %v332
        %v334 = vrot.slane %v320, %v333
        %v335 = vcombine.low %v311, %v317
        %v336 = vcombine.high %v311, %v317
        %v338 = vunpack.c.l.s4 1983009808
        %v339 = vunpack.c.0.s8 %v338
        %v340 = vlaneseq
        %v341 = vshrl.u32 %v340, 7
        %v342 = vsub.s32 %v339, %v341
        %v343 = vrot.slane %v335, %v342
        %v345 = vunpack.c.l.s4 1983009808
        %v346 = vunpack.c.0.s8 %v345
        %v347 = vlaneseq
        %v348 = vshrl.u32 %v347, 7
        %v349 = vsub.s32 %v346, %v348
        %v350 = vrot.slane %v336, %v349
        %v351 = vcombine.low %v327, %v343
        %v352 = vcombine.high %v327, %v343
        %v354 = vunpack.c.l.s4 1934713408
        %v355 = vunpack.c.0.s8 %v354
        %v356 = vlaneseq
        %v357 = vshrl.u32 %v356, 7
        %v358 = vsub.s32 %v355, %v357
        %v359 = vrot.slane %v351, %v358
        %v361 = vunpack.c.l.s4 1934713408
        %v362 = vunpack.c.0.s8 %v361
        %v363 = vlaneseq
        %v364 = vshrl.u32 %v363, 7
        %v365 = vsub.s32 %v362, %v364
        %v366 = vrot.slane %v352, %v365
        %v367 = vcombine.low %v334, %v350
        %v368 = vcombine.high %v334, %v350
        %v370 = vunpack.c.l.s4 1934713408
        %v371 = vunpack.c.0.s8 %v370
        %v372 = vlaneseq
        %v373 = vshrl.u32 %v372, 7
        %v374 = vsub.s32 %v371, %v373
        %v375 = vrot.slane %v367, %v374
        %v377 = vunpack.c.l.s4 1934713408
        %v378 = vunpack.c.0.s8 %v377
        %v379 = vlaneseq
        %v380 = vshrl.u32 %v379, 7
        %v381 = vsub.s32 %v378, %v380
        %v382 = vrot.slane %v368, %v381
        %v383 = vcombine.high %v359, 0.0
        %v384 = vcombine.high %v366, 0.0
        %v385 = vcombine.high %v375, 0.0
        %v386 = vcombine.high %v382, 0.0
        %v387 = vcombine.low %v359, %v366
        %v389 = vunpack.c.l.s4 1983009808
        %v390 = vunpack.c.0.s8 %v389
        %v391 = vlaneseq
        %v392 = vshrl.u32 %v391, 7
        %v393 = vsub.s32 %v390, %v392
        %v394 = vrot.slane %v387, %v393
        %v395 = vcombine.low %v383, %v384
        %v397 = vunpack.c.l.s4 1983009808
        %v398 = vunpack.c.0.s8 %v397
        %v399 = vlaneseq
        %v400 = vshrl.u32 %v399, 7
        %v401 = vsub.s32 %v398, %v400
        %v402 = vrot.slane %v395, %v401
        %v403 = vcombine.low %v375, %v382
        %v405 = vunpack.c.l.s4 1983009808
        %v406 = vunpack.c.0.s8 %v405
        %v407 = vlaneseq
        %v408 = vshrl.u32 %v407, 7
        %v409 = vsub.s32 %v406, %v408
        %v410 = vrot.slane %v403, %v409
        %v411 = vcombine.low %v385, %v386
        %v413 = vunpack.c.l.s4 1983009808
        %v414 = vunpack.c.0.s8 %v413
        %v415 = vlaneseq
        %v416 = vshrl.u32 %v415, 7
        %v417 = vsub.s32 %v414, %v416
        %v418 = vrot.slane %v411, %v417
        %v419 = vcombine.low %v394, %v402
        %v420 = vcombine.high %v394, %v402
        %v422 = vunpack.c.l.s4 1934713408
        %v423 = vunpack.c.0.s8 %v422
        %v424 = vlaneseq
        %v425 = vshrl.u32 %v424, 7
        %v426 = vsub.s32 %v423, %v425
        %v427 = vrot.slane %v419, %v426
        %v429 = vunpack.c.l.s4 1934713408
        %v430 = vunpack.c.0.s8 %v429
        %v431 = vlaneseq
        %v432 = vshrl.u32 %v431, 7
        %v433 = vsub.s32 %v430, %v432
        %v434 = vrot.slane %v420, %v433
        %v435 = vcombine.low %v410, %v418
        %v436 = vcombine.high %v410, %v418
        %v438 = vunpack.c.l.s4 1934713408
        %v439 = vunpack.c.0.s8 %v438
        %v440 = vlaneseq
        %v441 = vshrl.u32 %v440, 7
        %v442 = vsub.s32 %v439, %v441
        %v443 = vrot.slane %v435, %v442
        %v445 = vunpack.c.l.s4 1934713408
        %v446 = vunpack.c.0.s8 %v445
        %v447 = vlaneseq
        %v448 = vshrl.u32 %v447, 7
        %v449 = vsub.s32 %v446, %v448
        %v450 = vrot.slane %v436, %v449
        %v451 = vcombine.low %v427, %v443
        %v452 = vcombine.high %v427, %v443
        %v453 = vcombine.low %v434, %v450
        %v454 = vcombine.high %v434, %v450
        %455 = vrot.lane.b32.xlu0 %v304, 96
        %v456 = vpop.permute.xlu0 %455
        %457 = vrot.lane.b32.xlu0 %v311, 96
        %v458 = vpop.permute.xlu0 %457
        %459 = vrot.lane.b32.xlu0 %v314, 96
        %v460 = vpop.permute.xlu0 %459
        %461 = vrot.lane.b32.xlu0 %v317, 96
        %v462 = vpop.permute.xlu0 %461
        %v467 = vcombine.low %v456, %v460
        %v468 = vcombine.high %v456, %v460
        %v470 = vunpack.c.l.s4 1983009808
        %v471 = vunpack.c.0.s8 %v470
        %v472 = vlaneseq
        %v473 = vshrl.u32 %v472, 7
        %v474 = vsub.s32 %v471, %v473
        %v475 = vrot.slane %v467, %v474
        %v477 = vunpack.c.l.s4 1983009808
        %v478 = vunpack.c.0.s8 %v477
        %v479 = vlaneseq
        %v480 = vshrl.u32 %v479, 7
        %v481 = vsub.s32 %v478, %v480
        %v482 = vrot.slane %v468, %v481
        %v483 = vcombine.low %v458, %v462
        %v484 = vcombine.high %v458, %v462
        %v486 = vunpack.c.l.s4 1983009808
        %v487 = vunpack.c.0.s8 %v486
        %v488 = vlaneseq
        %v489 = vshrl.u32 %v488, 7
        %v490 = vsub.s32 %v487, %v489
        %v491 = vrot.slane %v483, %v490
        %v493 = vunpack.c.l.s4 1983009808
        %v494 = vunpack.c.0.s8 %v493
        %v495 = vlaneseq
        %v496 = vshrl.u32 %v495, 7
        %v497 = vsub.s32 %v494, %v496
        %v498 = vrot.slane %v484, %v497
        %v499 = vcombine.low %v475, %v491
        %v500 = vcombine.high %v475, %v491
        %v502 = vunpack.c.l.s4 1934713408
        %v503 = vunpack.c.0.s8 %v502
        %v504 = vlaneseq
        %v505 = vshrl.u32 %v504, 7
        %v506 = vsub.s32 %v503, %v505
        %v507 = vrot.slane %v499, %v506
        %v509 = vunpack.c.l.s4 1934713408
        %v510 = vunpack.c.0.s8 %v509
        %v511 = vlaneseq
        %v512 = vshrl.u32 %v511, 7
        %v513 = vsub.s32 %v510, %v512
        %v514 = vrot.slane %v500, %v513
        %v515 = vcombine.low %v482, %v498
        %v516 = vcombine.high %v482, %v498
        %v518 = vunpack.c.l.s4 1934713408
        %v519 = vunpack.c.0.s8 %v518
        %v520 = vlaneseq
        %v521 = vshrl.u32 %v520, 7
        %v522 = vsub.s32 %v519, %v521
        %v523 = vrot.slane %v515, %v522
        %v525 = vunpack.c.l.s4 1934713408
        %v526 = vunpack.c.0.s8 %v525
        %v527 = vlaneseq
        %v528 = vshrl.u32 %v527, 7
        %v529 = vsub.s32 %v526, %v528
        %v530 = vrot.slane %v516, %v529
        %v531 = vcombine.high %v507, 0.0
        %v532 = vcombine.high %v514, 0.0
        %v533 = vcombine.high %v523, 0.0
        %v534 = vcombine.high %v530, 0.0
        %v535 = vcombine.low %v507, %v514
        %v537 = vunpack.c.l.s4 1983009808
        %v538 = vunpack.c.0.s8 %v537
        %v539 = vlaneseq
        %v540 = vshrl.u32 %v539, 7
        %v541 = vsub.s32 %v538, %v540
        %v542 = vrot.slane %v535, %v541
        %v543 = vcombine.low %v531, %v532
        %v545 = vunpack.c.l.s4 1983009808
        %v546 = vunpack.c.0.s8 %v545
        %v547 = vlaneseq
        %v548 = vshrl.u32 %v547, 7
        %v549 = vsub.s32 %v546, %v548
        %v550 = vrot.slane %v543, %v549
        %v551 = vcombine.low %v523, %v530
        %v553 = vunpack.c.l.s4 1983009808
        %v554 = vunpack.c.0.s8 %v553
        %v555 = vlaneseq
        %v556 = vshrl.u32 %v555, 7
        %v557 = vsub.s32 %v554, %v556
        %v558 = vrot.slane %v551, %v557
        %v559 = vcombine.low %v533, %v534
        %v561 = vunpack.c.l.s4 1983009808
        %v562 = vunpack.c.0.s8 %v561
        %v563 = vlaneseq
        %v564 = vshrl.u32 %v563, 7
        %v565 = vsub.s32 %v562, %v564
        %v566 = vrot.slane %v559, %v565
        %v567 = vcombine.low %v542, %v550
        %v568 = vcombine.high %v542, %v550
        %v570 = vunpack.c.l.s4 1934713408
        %v571 = vunpack.c.0.s8 %v570
        %v572 = vlaneseq
        %v573 = vshrl.u32 %v572, 7
        %v574 = vsub.s32 %v571, %v573
        %v575 = vrot.slane %v567, %v574
        %v577 = vunpack.c.l.s4 1934713408
        %v578 = vunpack.c.0.s8 %v577
        %v579 = vlaneseq
        %v580 = vshrl.u32 %v579, 7
        %v581 = vsub.s32 %v578, %v580
        %v582 = vrot.slane %v568, %v581
        %v583 = vcombine.low %v558, %v566
        %v584 = vcombine.high %v558, %v566
        %v586 = vunpack.c.l.s4 1934713408
        %v587 = vunpack.c.0.s8 %v586
        %v588 = vlaneseq
        %v589 = vshrl.u32 %v588, 7
        %v590 = vsub.s32 %v587, %v589
        %v591 = vrot.slane %v583, %v590
        %v593 = vunpack.c.l.s4 1934713408
        %v594 = vunpack.c.0.s8 %v593
        %v595 = vlaneseq
        %v596 = vshrl.u32 %v595, 7
        %v597 = vsub.s32 %v594, %v596
        %v598 = vrot.slane %v584, %v597
        %v599 = vcombine.low %v575, %v591
        %v600 = vcombine.high %v575, %v591
        %v601 = vcombine.low %v582, %v598
        %v602 = vcombine.high %v582, %v598
        %603 = vrot.lane.b32.xlu0 %v304, 64
        %v604 = vpop.permute.xlu0 %603
        %605 = vrot.lane.b32.xlu0 %v311, 64
        %v606 = vpop.permute.xlu0 %605
        %607 = vrot.lane.b32.xlu0 %v314, 64
        %v608 = vpop.permute.xlu0 %607
        %609 = vrot.lane.b32.xlu0 %v317, 64
        %v610 = vpop.permute.xlu0 %609
        %v615 = vcombine.low %v604, %v608
        %v616 = vcombine.high %v604, %v608
        %v618 = vunpack.c.l.s4 1983009808
        %v619 = vunpack.c.0.s8 %v618
        %v620 = vlaneseq
        %v621 = vshrl.u32 %v620, 7
        %v622 = vsub.s32 %v619, %v621
        %v623 = vrot.slane %v615, %v622
        %v625 = vunpack.c.l.s4 1983009808
        %v626 = vunpack.c.0.s8 %v625
        %v627 = vlaneseq
        %v628 = vshrl.u32 %v627, 7
        %v629 = vsub.s32 %v626, %v628
        %v630 = vrot.slane %v616, %v629
        %v631 = vcombine.low %v606, %v610
        %v632 = vcombine.high %v606, %v610
        %v634 = vunpack.c.l.s4 1983009808
        %v635 = vunpack.c.0.s8 %v634
        %v636 = vlaneseq
        %v637 = vshrl.u32 %v636, 7
        %v638 = vsub.s32 %v635, %v637
        %v639 = vrot.slane %v631, %v638
        %v641 = vunpack.c.l.s4 1983009808
        %v642 = vunpack.c.0.s8 %v641
        %v643 = vlaneseq
        %v644 = vshrl.u32 %v643, 7
        %v645 = vsub.s32 %v642, %v644
        %v646 = vrot.slane %v632, %v645
        %v647 = vcombine.low %v623, %v639
        %v648 = vcombine.high %v623, %v639
        %v650 = vunpack.c.l.s4 1934713408
        %v651 = vunpack.c.0.s8 %v650
        %v652 = vlaneseq
        %v653 = vshrl.u32 %v652, 7
        %v654 = vsub.s32 %v651, %v653
        %v655 = vrot.slane %v647, %v654
        %v657 = vunpack.c.l.s4 1934713408
        %v658 = vunpack.c.0.s8 %v657
        %v659 = vlaneseq
        %v660 = vshrl.u32 %v659, 7
        %v661 = vsub.s32 %v658, %v660
        %v662 = vrot.slane %v648, %v661
        %v663 = vcombine.low %v630, %v646
        %v664 = vcombine.high %v630, %v646
        %v666 = vunpack.c.l.s4 1934713408
        %v667 = vunpack.c.0.s8 %v666
        %v668 = vlaneseq
        %v669 = vshrl.u32 %v668, 7
        %v670 = vsub.s32 %v667, %v669
        %v671 = vrot.slane %v663, %v670
        %v673 = vunpack.c.l.s4 1934713408
        %v674 = vunpack.c.0.s8 %v673
        %v675 = vlaneseq
        %v676 = vshrl.u32 %v675, 7
        %v677 = vsub.s32 %v674, %v676
        %v678 = vrot.slane %v664, %v677
        %v679 = vcombine.high %v655, 0.0
        %v680 = vcombine.high %v662, 0.0
        %v681 = vcombine.high %v671, 0.0
        %v682 = vcombine.high %v678, 0.0
        %v683 = vcombine.low %v655, %v662
        %v685 = vunpack.c.l.s4 1983009808
        %v686 = vunpack.c.0.s8 %v685
        %v687 = vlaneseq
        %v688 = vshrl.u32 %v687, 7
        %v689 = vsub.s32 %v686, %v688
        %v690 = vrot.slane %v683, %v689
        %v691 = vcombine.low %v679, %v680
        %v693 = vunpack.c.l.s4 1983009808
        %v694 = vunpack.c.0.s8 %v693
        %v695 = vlaneseq
        %v696 = vshrl.u32 %v695, 7
        %v697 = vsub.s32 %v694, %v696
        %v698 = vrot.slane %v691, %v697
        %v699 = vcombine.low %v671, %v678
        %v701 = vunpack.c.l.s4 1983009808
        %v702 = vunpack.c.0.s8 %v701
        %v703 = vlaneseq
        %v704 = vshrl.u32 %v703, 7
        %v705 = vsub.s32 %v702, %v704
        %v706 = vrot.slane %v699, %v705
        %v707 = vcombine.low %v681, %v682
        %v709 = vunpack.c.l.s4 1983009808
        %v710 = vunpack.c.0.s8 %v709
        %v711 = vlaneseq
        %v712 = vshrl.u32 %v711, 7
        %v713 = vsub.s32 %v710, %v712
        %v714 = vrot.slane %v707, %v713
        %v715 = vcombine.low %v690, %v698
        %v716 = vcombine.high %v690, %v698
        %v718 = vunpack.c.l.s4 1934713408
        %v719 = vunpack.c.0.s8 %v718
        %v720 = vlaneseq
        %v721 = vshrl.u32 %v720, 7
        %v722 = vsub.s32 %v719, %v721
        %v723 = vrot.slane %v715, %v722
        %v725 = vunpack.c.l.s4 1934713408
        %v726 = vunpack.c.0.s8 %v725
        %v727 = vlaneseq
        %v728 = vshrl.u32 %v727, 7
        %v729 = vsub.s32 %v726, %v728
        %v730 = vrot.slane %v716, %v729
        %v731 = vcombine.low %v706, %v714
        %v732 = vcombine.high %v706, %v714
        %v734 = vunpack.c.l.s4 1934713408
        %v735 = vunpack.c.0.s8 %v734
        %v736 = vlaneseq
        %v737 = vshrl.u32 %v736, 7
        %v738 = vsub.s32 %v735, %v737
        %v739 = vrot.slane %v731, %v738
        %v741 = vunpack.c.l.s4 1934713408
        %v742 = vunpack.c.0.s8 %v741
        %v743 = vlaneseq
        %v744 = vshrl.u32 %v743, 7
        %v745 = vsub.s32 %v742, %v744
        %v746 = vrot.slane %v732, %v745
        %v747 = vcombine.low %v723, %v739
        %v748 = vcombine.high %v723, %v739
        %v749 = vcombine.low %v730, %v746
        %v750 = vcombine.high %v730, %v746
        %v751 = vmul.f32 %v451, 0.35355338
        %v752 = vmul.f32 %v452, 0.35355338
        %v753 = vmul.f32 %v453, 0.35355338
        %v754 = vmul.f32 %v454, 0.35355338
        %v755 = vpack.c.bf16 %v751, %v751
        %v756 = vpack.c.bf16 %v752, %v752
        %v757 = vpack.c.bf16 %v753, %v753
        %v758 = vpack.c.bf16 %v754, %v754
        %vm759 = vcmask 60416
        %760 = vst.msk [vmem:[%s231] sm:$0xf] %vm759, %v755
        %761 = vst.msk [vmem:[%s231 + $0x4] sm:$0xf] %vm759, %v756
        %762 = vst.msk [vmem:[%s231 + $0x8] sm:$0xf] %vm759, %v757
        %763 = vst.msk [vmem:[%s231 + $0xc] sm:$0xf] %vm759, %v758
        %v764 = vpack.c.bf16 %v599, %v599
        %v765 = vpack.c.bf16 %v600, %v600
        %v766 = vpack.c.bf16 %v601, %v601
        %v767 = vpack.c.bf16 %v602, %v602
        %768 = vst.msk [vmem:[%s238] sm:$0xf] %vm759, %v764
        %769 = vst.msk [vmem:[%s238 + $0x4] sm:$0xf] %vm759, %v765
        %770 = vst.msk [vmem:[%s238 + $0x8] sm:$0xf] %vm759, %v766
        %771 = vst.msk [vmem:[%s238 + $0xc] sm:$0xf] %vm759, %v767
        %v772 = vpack.c.bf16 %v747, %v747
        %v773 = vpack.c.bf16 %v748, %v748
        %v774 = vpack.c.bf16 %v749, %v749
        %v775 = vpack.c.bf16 %v750, %v750
        %776 = vst.msk [vmem:[%s245] sm:$0xf] %vm759, %v772
        %777 = vst.msk [vmem:[%s245 + $0x4] sm:$0xf] %vm759, %v773
        %778 = vst.msk [vmem:[%s245 + $0x8] sm:$0xf] %vm759, %v774
        %779 = vst.msk [vmem:[%s245 + $0xc] sm:$0xf] %vm759, %v775
        %s780 = sand.u32 %s81, 1
        %s781 = scalar_lea.sflag [#allocation4], %s780
        %s782 = sand.u32 %s81, 1
        %s783 = smul.addr %s782, 16
        %s784 = scalar_lea.vmem [#allocation7], %s783
        %s785 = sand.u32 %s26, 1
        %s786 = scalar_lea.sflag [#allocation9], %s785
        %s787 = sand.u32 %s107, 1
        %s788 = smul.addr %s787, 16
        %s789 = scalar_lea.vmem [#allocation8], %s788
        %s790 = sand.u32 %s26, 1
        %s791 = scalar_lea.sflag [#allocation9], %s790
        %s792 = sand.u32 %s133, 1
        %s793 = smul.addr %s792, 16
        %s794 = scalar_lea.vmem [#allocation10], %s793
        // Predicated region
        $region37: #{tpu_custom_call.1} parent=27 // pred_check
          %p795 = pneg %p91
        $region38: #{tpu_custom_call.1} parent=27 // pred_check_branch
          %797 = sbr.rel (%p795) target = $region40
        $region39: #{tpu_custom_call.1} parent=27 // pred_region
          %s799 = ssub.s32 256, 256
          %800 = vsyncadd %s781, %s799
          %s801 = smul.addr %s26, 4
          %s802 = smul.addr %s801, 64
          %s803 = scalar_lea.hbm %s2, %s802
          %s804 = sshll.u32 %s784, 4
          %s805 = int_to_ptr.vmem [resolvable:$true] %s804
          %810 = dma.vmem_to_hbm [thread:$0]  %s805, 256, %s803, %s781, 64, 64, 4
        $region40: #{tpu_custom_call.1} parent=27 // pred_fallthru
          _
        // Predicated region
        $region41: #{tpu_custom_call.1} parent=27 // pred_check
          %p811 = pneg %p117
        $region42: #{tpu_custom_call.1} parent=27 // pred_check_branch
          %813 = sbr.rel (%p811) target = $region44
        $region43: #{tpu_custom_call.1} parent=27 // pred_region
          %s815 = ssub.s32 256, 256
          %816 = vsyncadd %s786, %s815
          %s817 = smul.addr %s26, 4
          %s818 = smul.addr %s817, 64
          %s819 = scalar_lea.hbm %s3, %s818
          %s820 = sshll.u32 %s789, 4
          %s821 = int_to_ptr.vmem [resolvable:$true] %s820
          %826 = dma.vmem_to_hbm [thread:$0]  %s821, 256, %s819, %s786, 64, 64, 4
        $region44: #{tpu_custom_call.1} parent=27 // pred_fallthru
          _
        // Predicated region
        $region45: #{tpu_custom_call.1} parent=27 // pred_check
          %p827 = pneg %p143
        $region46: #{tpu_custom_call.1} parent=27 // pred_check_branch
          %829 = sbr.rel (%p827) target = $region48
        $region47: #{tpu_custom_call.1} parent=27 // pred_region
          %s831 = ssub.s32 256, 256
          %832 = vsyncadd %s791, %s831
          %s833 = smul.addr %s26, 4
          %s834 = smul.addr %s833, 64
          %s835 = scalar_lea.hbm %s4, %s834
          %s836 = sshll.u32 %s794, 4
          %s837 = int_to_ptr.vmem [resolvable:$true] %s836
          %842 = dma.vmem_to_hbm [thread:$0]  %s837, 256, %s835, %s791, 64, 64, 4
        $region48: #{tpu_custom_call.1} parent=27 // pred_fallthru
          _
      $region28: #{tpu_custom_call.1} parent=5 // pred_fallthru
        _
      %p843 = scmp.le.s32.totalorder 2, %s21
      // Predicated region
      $region49: #{tpu_custom_call.1} parent=5 // pred_check
        %p844 = pneg %p843
      $region50: #{tpu_custom_call.1} parent=5 // pred_check_branch
        %846 = sbr.rel (%p844) target = $region52
      $region51: #{tpu_custom_call.1} parent=5 // pred_region
        %s847 = ssub.s32 %s21, 2
        // Predicated region
        $region53: #{tpu_custom_call.1} parent=51 // pred_check
          %p848 = pneg %p97
        $region54: #{tpu_custom_call.1} parent=51 // pred_check_branch
          %850 = sbr.rel (%p848) target = $region56
        $region55: #{tpu_custom_call.1} parent=51 // pred_region
          %s851 = sand.u32 %s82, 1
          %s852 = scalar_lea.sflag [#allocation4], %s851
          %s853 = sand.u32 %s82, 1
          %s854 = smul.addr %s853, 16
          %s855 = scalar_lea.vmem [#allocation7], %s854
          %856 = dma.done %s852, 256
        $region56: #{tpu_custom_call.1} parent=51 // pred_fallthru
          _
        // Predicated region
        $region57: #{tpu_custom_call.1} parent=51 // pred_check
          %p857 = pneg %p123
        $region58: #{tpu_custom_call.1} parent=51 // pred_check_branch
          %859 = sbr.rel (%p857) target = $region60
        $region59: #{tpu_custom_call.1} parent=51 // pred_region
          %s860 = sand.u32 %s27, 1
          %s861 = scalar_lea.sflag [#allocation9], %s860
          %s862 = sand.u32 %s108, 1
          %s863 = smul.addr %s862, 16
          %s864 = scalar_lea.vmem [#allocation8], %s863
          %865 = dma.done %s861, 256
        $region60: #{tpu_custom_call.1} parent=51 // pred_fallthru
          _
        // Predicated region
        $region61: #{tpu_custom_call.1} parent=51 // pred_check
          %p866 = pneg %p149
        $region62: #{tpu_custom_call.1} parent=51 // pred_check_branch
          %868 = sbr.rel (%p866) target = $region64
        $region63: #{tpu_custom_call.1} parent=51 // pred_region
          %s869 = sand.u32 %s27, 1
          %s870 = scalar_lea.sflag [#allocation9], %s869
          %s871 = sand.u32 %s134, 1
          %s872 = smul.addr %s871, 16
          %s873 = scalar_lea.vmem [#allocation10], %s872
          %874 = dma.done %s870, 256
        $region64: #{tpu_custom_call.1} parent=51 // pred_fallthru
          _
      $region52: #{tpu_custom_call.1} parent=5 // pred_fallthru
        _
    $region6: #{tpu_custom_call.1} parent=1 // loop_footer
      %s25 = sadd.s32 1, %s21
    $region7: #{tpu_custom_call.1} parent=1 // loop_footer_branch
      %20 = sbr.rel target = $region3
    $region8: #{tpu_custom_call.1} parent=1 // loop_exit
      _
    %875 = vsyncpa [#allocation3], 1
    %s876 = scalar_lea.sflag [#allocation3], 1
    %877 = vsyncpa %s876, 1
    %878 = vsyncpa [#allocation6], 1
    %879 = vsyncpa [#allocation4], 1
    %s880 = scalar_lea.sflag [#allocation4], 1
    %881 = vsyncpa %s880, 1
    %882 = vsyncpa [#allocation9], 1
    %s883 = scalar_lea.sflag [#allocation9], 1
    %884 = vsyncpa %s883, 1

</llo_original>
